<compile_context>
chip_gen: v7x
topology: tpu7x:2x2x1
jax: 0.10.0
libtpu: 0.0.40
codegen_flags: <defaults>
</compile_context>

<pallas_src>
import functools

import jax
import jax.numpy as jnp
from jax import lax
from jax.experimental import pallas as pl
from jax.experimental.pallas import tpu as pltpu

TEMPERATURE = 0.07
_X_VMEM_BUDGET = 32 * 1024 * 1024   # budget for double-buffered x1+x2 tiles
_VMEM_LIMIT = 64 * 1024 * 1024      # explicit scoped-VMEM limit (v7x physical)


def _round_up(v, m):
    return (v + m - 1) // m * m


def _pick_divisor(n, cap, step):
    """Largest multiple of `step` <= cap that divides n (falls back to n)."""
    t = min(n, cap)
    t -= t % step
    while t >= step and n % t:
        t -= step
    return t if t >= step else n


def _pick_row_tile(rows):
    """rows is a multiple of 8.  Prefer >= 2 row tiles so the 'parallel' grid
    axis can be sharded across TensorCores (v7x megacore); cap at 256."""
    for t in (256, 128, 64, 32, 16, 8):
        if rows % t == 0 and rows // t >= 2:
            return t
    return min(rows, 256) if rows % min(rows, 256) == 0 else 8


# ---------------------------------------------------------------------------
# Encoder kernel:  z = L2norm( relu( GAP(x) @ W1 + b1 ) @ W2 + b2 )
# grid = (row_tiles, spatial_tiles); spatial is the accumulation axis.
# ---------------------------------------------------------------------------
def _encode_kernel(x1_ref, x2_ref, w1_ref, b1_ref, w2_ref, b2_ref,
                   z1_ref, z2_ref, p1_ref, p2_ref, *, inv_hw, n_ch):
    s = pl.program_id(1)

    @pl.when(s == 0)
    def _():
        p1_ref[...] = jnp.zeros_like(p1_ref)
        p2_ref[...] = jnp.zeros_like(p2_ref)

    # Spatial partial sums on the XLU (lane reduce); channels stay un-pooled.
    p1_ref[:, 0:n_ch] += jnp.sum(x1_ref[...], axis=-1)
    p2_ref[:, 0:n_ch] += jnp.sum(x2_ref[...], axis=-1)

    @pl.when(s == pl.num_programs(1) - 1)
    def _():
        def head(pooled_sum):
            pooled = (pooled_sum * inv_hw).astype(jnp.bfloat16)      # (tr, C_p)
            h = jnp.dot(pooled, w1_ref[...],
                        preferred_element_type=jnp.float32) + b1_ref[...]
            h = jnp.maximum(h, 0.0)                                  # ReLU (f32)
            z = jnp.dot(h.astype(jnp.bfloat16), w2_ref[...],
                        preferred_element_type=jnp.float32) + b2_ref[...]
            inv_norm = lax.rsqrt(jnp.sum(z * z, axis=-1, keepdims=True) + 1e-12)
            return z * inv_norm

        z1_ref[...] = head(p1_ref[...])
        z2_ref[...] = head(p2_ref[...])


def _encode(x1, x2, w1, b1, w2, b2, *, tr, t_hw):
    rows, C, HW = x1.shape
    C_p, hid_p = w1.shape
    feat_p = w2.shape[1]
    grid = (rows // tr, HW // t_hw)

    kernel = functools.partial(_encode_kernel, inv_hw=1.0 / HW, n_ch=C)

    flops = 2 * (rows * C * HW                  # pooling adds
                 + 2 * rows * C_p * hid_p       # layer 1
                 + 2 * rows * hid_p * feat_p)   # layer 2
    bytes_accessed = (2 * rows * C * HW * 4                         # x reads
                      + (C_p * hid_p + hid_p * feat_p) * 2          # bf16 W
                      + (hid_p + feat_p) * 4                        # biases
                      + 2 * rows * feat_p * 4)                      # z writes

    return pl.pallas_call(
        kernel,
        out_shape=(jax.ShapeDtypeStruct((rows, feat_p), jnp.float32),
                   jax.ShapeDtypeStruct((rows, feat_p), jnp.float32)),
        grid_spec=pltpu.PrefetchScalarGridSpec(
            num_scalar_prefetch=0,
            grid=grid,
            in_specs=[
                pl.BlockSpec((tr, C, t_hw), lambda r, s: (r, 0, s)),   # x1
                pl.BlockSpec((tr, C, t_hw), lambda r, s: (r, 0, s)),   # x2
                pl.BlockSpec((C_p, hid_p), lambda r, s: (0, 0)),       # W1 (resident)
                pl.BlockSpec((1, hid_p), lambda r, s: (0, 0)),         # b1
                pl.BlockSpec((hid_p, feat_p), lambda r, s: (0, 0)),    # W2 (resident)
                pl.BlockSpec((1, feat_p), lambda r, s: (0, 0)),        # b2
            ],
            out_specs=[
                pl.BlockSpec((tr, feat_p), lambda r, s: (r, 0)),       # z1
                pl.BlockSpec((tr, feat_p), lambda r, s: (r, 0)),       # z2
            ],
            scratch_shapes=[pltpu.VMEM((tr, C_p), jnp.float32),
                            pltpu.VMEM((tr, C_p), jnp.float32)],
        ),
        compiler_params=pltpu.CompilerParams(
            dimension_semantics=("parallel", "arbitrary"),
            vmem_limit_bytes=_VMEM_LIMIT),
        cost_estimate=pl.CostEstimate(
            flops=flops, transcendentals=2 * rows,
            bytes_accessed=bytes_accessed),
    )(x1, x2, w1, b1, w2, b2)


# ---------------------------------------------------------------------------
# Contrastive logits kernel:  logits = (z1 @ z2^T) / T   (NT matmul, bf16 in,
# f32 accumulate, lane-dense 128-padded column tiles)
# ---------------------------------------------------------------------------
def _logits_kernel(z1_ref, z2_ref, o_ref, *, inv_temp):
    o_ref[...] = lax.dot_general(
        z1_ref[...], z2_ref[...],
        dimension_numbers=(((1,), (1,)), ((), ())),
        preferred_element_type=jnp.float32) * inv_temp


def _contrastive_logits(z1, z2, *, temperature):
    rows, feat_p = z1.shape               # rows is a multiple of 8
    ncol = _round_up(rows, 128)           # lane-dense logits columns
    z1b = z1.astype(jnp.bfloat16)
    z2b = jnp.pad(z2, ((0, ncol - rows), (0, 0))).astype(jnp.bfloat16)

    tbr = _pick_divisor(rows, 256, 8)
    tbc = _pick_divisor(ncol, 1024, 128)
    kernel = functools.partial(_logits_kernel, inv_temp=1.0 / temperature)
    return pl.pallas_call(
        kernel,
        out_shape=jax.ShapeDtypeStruct((rows, ncol), jnp.float32),
        grid_spec=pltpu.PrefetchScalarGridSpec(
            num_scalar_prefetch=0,
            grid=(rows // tbr, ncol // tbc),
            in_specs=[
                pl.BlockSpec((tbr, feat_p), lambda i, j: (i, 0)),
                pl.BlockSpec((tbc, feat_p), lambda i, j: (j, 0)),
            ],
            out_specs=pl.BlockSpec((tbr, tbc), lambda i, j: (i, j)),
        ),
        compiler_params=pltpu.CompilerParams(
            dimension_semantics=("parallel", "parallel")),
    )(z1b, z2b)


# ---------------------------------------------------------------------------
# Wrapper
# ---------------------------------------------------------------------------
def base_model_forward(x1, x2, params, *, temperature=TEMPERATURE):
    """x1, x2: (B, C, H, W) float32.  Returns (logits, labels, z1, z2)."""
    B, C, H, W = x1.shape
    HW = H * W
    w1, b1, w2, b2 = params["w1"], params["b1"], params["w2"], params["b2"]
    hid = w1.shape[1]
    feat = w2.shape[1]

    # Lane-aligned padded head dims (tiny weights; un-expanded W1).
    C_p = _round_up(C, 128)
    hid_p = _round_up(hid, 128)
    feat_p = _round_up(feat, 128)

    w1_p = jnp.pad(w1, ((0, C_p - C), (0, hid_p - hid))).astype(jnp.bfloat16)
    b1_p = jnp.pad(jnp.reshape(b1, (1, hid)),
                   ((0, 0), (0, hid_p - hid))).astype(jnp.float32)
    w2_p = jnp.pad(w2, ((0, hid_p - hid),
                        (0, feat_p - feat))).astype(jnp.bfloat16)
    b2_p = jnp.pad(jnp.reshape(b2, (1, feat)),
                   ((0, 0), (0, feat_p - feat))).astype(jnp.float32)

    # Stream activations as-is (f32, (B, C, HW)); pad batch rows to a multiple
    # of 8 only when needed — no spatial padding, no bf16 HBM copy of x.
    x1r = jnp.reshape(x1, (B, C, HW))
    x2r = jnp.reshape(x2, (B, C, HW))
    b_work = max(_round_up(B, 8), 8)
    if b_work != B:
        row_pad = ((0, b_work - B), (0, 0), (0, 0))
        x1r = jnp.pad(x1r, row_pad)
        x2r = jnp.pad(x2r, row_pad)

    # Tile selection: row tile (multiple of 8, <=256), spatial tile (<=512,
    # multiple of 128 when HW allows), shrunk to fit the VMEM budget.
    tr = _pick_row_tile(b_work)
    t_hw = _pick_divisor(HW, 512, 128) if HW % 128 == 0 else HW

    def x_block_bytes(tr_, thw_):
        return 2 * 2 * tr_ * C * thw_ * 4   # 2 views, double-buffered, f32

    while (x_block_bytes(tr, t_hw) > _X_VMEM_BUDGET and tr > 8
           and b_work % (tr // 2) == 0):
        tr //= 2
    cap = 512
    while (x_block_bytes(tr, t_hw) > _X_VMEM_BUDGET and HW % 128 == 0
           and t_hw > 128):
        cap = max(128, cap // 2)
        t_hw = _pick_divisor(HW, cap, 128)
    # TODO(synk): extremely large C*HW per row (beyond the VMEM budget even at
    # tr=8, t_hw=128) would additionally need a channel grid axis.

    z1_full, z2_full = _encode(x1r, x2r, w1_p, b1_p, w2_p, b2_p,
                               tr=tr, t_hw=t_hw)        # (b_work, feat_p) f32

    logits_pad = _contrastive_logits(z1_full, z2_full, temperature=temperature)

    logits = logits_pad[:B, :B]
    labels = jnp.arange(B, dtype=jnp.int32)
    z1 = z1_full[:B, :feat]
    z2 = z2_full[:B, :feat]
    return logits, labels, z1, z2


def init_params(key, channels, hidden, feature_dim):
    k1, k2 = jax.random.split(key)
    w1 = jax.random.normal(k1, (channels, hidden), jnp.float32) * 0.1
    b1 = jnp.zeros((1, hidden), jnp.float32)
    w2 = jax.random.normal(k2, (hidden, feature_dim), jnp.float32) * 0.1
    b2 = jnp.zeros((1, feature_dim), jnp.float32)
    return {"w1": w1, "b1": b1, "w2": w2, "b2": b2}


if __name__ == "__main__":
    # TODO(synk): BaseModel.forward is abstract and `base_encoder` is injected
    # externally; this realizes the canonical contrastive path with a
    # GAP + 2-layer MLP-head stand-in encoder.
    B, C, H, W = 2, 4, 16, 16
    hidden, feature_dim = 32, 16   # args.feature_dim=16, args.mlp_head=True

    key = jax.random.PRNGKey(0)
    kx1, kx2, kp = jax.random.split(key, 3)
    x1 = jax.random.normal(kx1, (B, C, H, W), jnp.float32)
    x2 = jax.random.normal(kx2, (B, C, H, W), jnp.float32)
    params = init_params(kp, C, hidden, feature_dim)

    logits, labels, z1, z2 = base_model_forward(x1, x2, params)
    jax.block_until_ready((logits, labels, z1, z2))

    # Pure-JAX f32 reference (kernel uses bf16 matmuls -> loose tolerances).
    def ref_encode(x):
        pooled = jnp.mean(jnp.reshape(x, (B, C, H * W)), axis=-1)
        h = jnp.maximum(pooled @ params["w1"] + params["b1"], 0.0)
        z = h @ params["w2"] + params["b2"]
        return z / jnp.linalg.norm(z, axis=-1, keepdims=True)

    r1, r2 = ref_encode(x1), ref_encode(x2)
    ref_logits = (r1 @ r2.T) / TEMPERATURE

    assert logits.shape == (B, B) and labels.shape == (B,)
    assert z1.shape == (B, feature_dim) and z2.shape == (B, feature_dim)
    assert bool(jnp.all(jnp.isfinite(logits)))
    assert bool(jnp.allclose(z1, r1, atol=5e-2, rtol=5e-2))
    assert bool(jnp.allclose(z2, r2, atol=5e-2, rtol=5e-2))
    assert bool(jnp.allclose(logits, ref_logits, atol=7.5e-1, rtol=5e-2))
    print("KERNEL_OK")
</pallas_src>

<mosaic_0001>
module attributes {stable_mosaic.version = 11 : i64} {
  func.func @_encode_kernel(%arg0: i32, %arg1: i32, %arg2: memref<8x4x256xf32, #tpu.memory_space<vmem>>, %arg3: memref<8x4x256xf32, #tpu.memory_space<vmem>>, %arg4: memref<128x128xbf16, #tpu.memory_space<vmem>>, %arg5: memref<1x128xf32, #tpu.memory_space<vmem>>, %arg6: memref<128x128xbf16, #tpu.memory_space<vmem>>, %arg7: memref<1x128xf32, #tpu.memory_space<vmem>>, %arg8: memref<8x128xf32, #tpu.memory_space<vmem>>, %arg9: memref<8x128xf32, #tpu.memory_space<vmem>>, %arg10: memref<8x128xf32, #tpu.memory_space<vmem>>, %arg11: memref<8x128xf32, #tpu.memory_space<vmem>>) attributes {dimension_semantics = [#tpu.dimension_semantics<parallel>, #tpu.dimension_semantics<arbitrary>], iteration_bounds = array<i64: 1, 1>, scalar_prefetch = 0 : i64, scratch_operands = 2 : i64, tpu.core_type = #tpu.core_type<tc>, window_params = [{transform_indices = @transform_0, window_bounds = array<i64: 8, 4, 256>}, {transform_indices = @transform_1, window_bounds = array<i64: 8, 4, 256>}, {pipeline_mode = #tpu.pipeline_mode<synchronous>, transform_indices = @transform_2, window_bounds = array<i64: 128, 128>}, {pipeline_mode = #tpu.pipeline_mode<synchronous>, transform_indices = @transform_3, window_bounds = array<i64: 1, 128>}, {pipeline_mode = #tpu.pipeline_mode<synchronous>, transform_indices = @transform_4, window_bounds = array<i64: 128, 128>}, {pipeline_mode = #tpu.pipeline_mode<synchronous>, transform_indices = @transform_5, window_bounds = array<i64: 1, 128>}, {transform_indices = @transform_6, window_bounds = array<i64: 8, 128>}, {transform_indices = @transform_7, window_bounds = array<i64: 8, 128>}]} {
    %c0_i32 = arith.constant 0 : i32
    %0 = arith.cmpi eq, %arg1, %c0_i32 : i32
    %1 = arith.extui %0 : i1 to i32
    %c0_i32_0 = arith.constant 0 : i32
    %2 = arith.cmpi ne, %1, %c0_i32_0 : i32
    scf.if %2 {
      %cst_17 = arith.constant 0.000000e+00 : f32
      %16 = vector.broadcast %cst_17 : f32 to vector<8x128xf32>
      %c0_18 = arith.constant 0 : index
      %c0_19 = arith.constant 0 : index
      %17 = vector.load %arg10[%c0_18, %c0_19] : memref<8x128xf32, #tpu.memory_space<vmem>>, vector<8x128xf32>
      tpu.vector_store %arg10[%c0_18, %c0_19], %16 {strides = array<i32>} : memref<8x128xf32, #tpu.memory_space<vmem>>, vector<8x128xf32>,
      %cst_20 = arith.constant 0.000000e+00 : f32
      %18 = vector.broadcast %cst_20 : f32 to vector<8x128xf32>
      %c0_21 = arith.constant 0 : index
      %c0_22 = arith.constant 0 : index
      %19 = vector.load %arg11[%c0_21, %c0_22] : memref<8x128xf32, #tpu.memory_space<vmem>>, vector<8x128xf32>
      tpu.vector_store %arg11[%c0_21, %c0_22], %18 {strides = array<i32>} : memref<8x128xf32, #tpu.memory_space<vmem>>, vector<8x128xf32>,
    } else {
    }
    %c0 = arith.constant 0 : index
    %c0_1 = arith.constant 0 : index
    %3 = vector.load %arg10[%c0, %c0_1] : memref<8x128xf32, #tpu.memory_space<vmem>>, vector<8x4xf32>
    %c0_2 = arith.constant 0 : index
    %c0_3 = arith.constant 0 : index
    %c0_4 = arith.constant 0 : index
    %4 = vector.load %arg2[%c0_2, %c0_3, %c0_4] : memref<8x4x256xf32, #tpu.memory_space<vmem>>, vector<8x4x256xf32>
    %cst = arith.constant dense<0.000000e+00> : vector<8x4xf32>
    %5 = vector.multi_reduction <add>, %4, %cst [2] : vector<8x4x256xf32> to vector<8x4xf32>
    %6 = arith.addf %3, %5 : vector<8x4xf32>
    %c0_5 = arith.constant 0 : index
    %c0_6 = arith.constant 0 : index
    %7 = vector.load %arg10[%c0_5, %c0_6] : memref<8x128xf32, #tpu.memory_space<vmem>>, vector<8x4xf32>
    tpu.vector_store %arg10[%c0_5, %c0_6], %6 {strides = array<i32>} : memref<8x128xf32, #tpu.memory_space<vmem>>, vector<8x4xf32>,
    %c0_7 = arith.constant 0 : index
    %c0_8 = arith.constant 0 : index
    %8 = vector.load %arg11[%c0_7, %c0_8] : memref<8x128xf32, #tpu.memory_space<vmem>>, vector<8x4xf32>
    %c0_9 = arith.constant 0 : index
    %c0_10 = arith.constant 0 : index
    %c0_11 = arith.constant 0 : index
    %9 = vector.load %arg3[%c0_9, %c0_10, %c0_11] : memref<8x4x256xf32, #tpu.memory_space<vmem>>, vector<8x4x256xf32>
    %cst_12 = arith.constant dense<0.000000e+00> : vector<8x4xf32>
    %10 = vector.multi_reduction <add>, %9, %cst_12 [2] : vector<8x4x256xf32> to vector<8x4xf32>
    %11 = arith.addf %8, %10 : vector<8x4xf32>
    %c0_13 = arith.constant 0 : index
    %c0_14 = arith.constant 0 : index
    %12 = vector.load %arg11[%c0_13, %c0_14] : memref<8x128xf32, #tpu.memory_space<vmem>>, vector<8x4xf32>
    tpu.vector_store %arg11[%c0_13, %c0_14], %11 {strides = array<i32>} : memref<8x128xf32, #tpu.memory_space<vmem>>, vector<8x4xf32>,
    %c0_i32_15 = arith.constant 0 : i32
    %13 = arith.cmpi eq, %arg1, %c0_i32_15 : i32
    %14 = arith.extui %13 : i1 to i32
    %c0_i32_16 = arith.constant 0 : i32
    %15 = arith.cmpi ne, %14, %c0_i32_16 : i32
    scf.if %15 {
      %c0_17 = arith.constant 0 : index
      %c0_18 = arith.constant 0 : index
      %16 = vector.load %arg10[%c0_17, %c0_18] : memref<8x128xf32, #tpu.memory_space<vmem>>, vector<8x128xf32>
      %cst_19 = arith.constant 3.906250e-03 : f32
      %17 = vector.broadcast %cst_19 : f32 to vector<8x128xf32>
      %18 = arith.mulf %16, %17 : vector<8x128xf32>
      %19 = arith.truncf %18 : vector<8x128xf32> to vector<8x128xbf16>
      %c0_20 = arith.constant 0 : index
      %c0_21 = arith.constant 0 : index
      %20 = vector.load %arg4[%c0_20, %c0_21] : memref<128x128xbf16, #tpu.memory_space<vmem>>, vector<128x128xbf16>
      %cst_22 = arith.constant dense<0.000000e+00> : vector<8x128xf32>
      %21 = tpu.matmul %19, %20, %cst_22 {dimension_numbers = #tpu.dot_dimension_numbers<[1], [0], [0], [1], [0, 0, 1, 1], [], []>} : vector<8x128xbf16>, vector<128x128xbf16>, vector<8x128xf32> -> vector<8x128xf32>
      %c0_23 = arith.constant 0 : index
      %c0_24 = arith.constant 0 : index
      %22 = vector.load %arg5[%c0_23, %c0_24] : memref<1x128xf32, #tpu.memory_space<vmem>>, vector<1x128xf32>
      %23 = vector.broadcast %22 : vector<1x128xf32> to vector<8x128xf32>
      %24 = arith.addf %21, %23 : vector<8x128xf32>
      %cst_25 = arith.constant 0.000000e+00 : f32
      %25 = vector.broadcast %cst_25 : f32 to vector<8x128xf32>
      %26 = arith.maximumf %24, %25 : vector<8x128xf32>
      %27 = arith.truncf %26 : vector<8x128xf32> to vector<8x128xbf16>
      %c0_26 = arith.constant 0 : index
      %c0_27 = arith.constant 0 : index
      %28 = vector.load %arg6[%c0_26, %c0_27] : memref<128x128xbf16, #tpu.memory_space<vmem>>, vector<128x128xbf16>
      %cst_28 = arith.constant dense<0.000000e+00> : vector<8x128xf32>
      %29 = tpu.matmul %27, %28, %cst_28 {dimension_numbers = #tpu.dot_dimension_numbers<[1], [0], [0], [1], [0, 0, 1, 1], [], []>} : vector<8x128xbf16>, vector<128x128xbf16>, vector<8x128xf32> -> vector<8x128xf32>
      %c0_29 = arith.constant 0 : index
      %c0_30 = arith.constant 0 : index
      %30 = vector.load %arg7[%c0_29, %c0_30] : memref<1x128xf32, #tpu.memory_space<vmem>>, vector<1x128xf32>
      %31 = vector.broadcast %30 : vector<1x128xf32> to vector<8x128xf32>
      %32 = arith.addf %29, %31 : vector<8x128xf32>
      %33 = arith.mulf %32, %32 : vector<8x128xf32>
      %cst_31 = arith.constant dense<0.000000e+00> : vector<8xf32>
      %34 = vector.multi_reduction <add>, %33, %cst_31 [1] : vector<8x128xf32> to vector<8xf32>
      %35 = vector.shape_cast %34 : vector<8xf32> to vector<8x1xf32>
      %cst_32 = arith.constant 9.99999996E-13 : f32
      %36 = vector.broadcast %cst_32 : f32 to vector<8x1xf32>
      %37 = arith.addf %35, %36 : vector<8x1xf32>
      %38 = math.rsqrt %37 : vector<8x1xf32>
      %39 = vector.broadcast %38 : vector<8x1xf32> to vector<8x128xf32>
      %40 = arith.mulf %32, %39 : vector<8x128xf32>
      %c0_33 = arith.constant 0 : index
      %c0_34 = arith.constant 0 : index
      %41 = vector.load %arg8[%c0_33, %c0_34] : memref<8x128xf32, #tpu.memory_space<vmem>>, vector<8x128xf32>
      tpu.vector_store %arg8[%c0_33, %c0_34], %40 {strides = array<i32>} : memref<8x128xf32, #tpu.memory_space<vmem>>, vector<8x128xf32>,
      %c0_35 = arith.constant 0 : index
      %c0_36 = arith.constant 0 : index
      %42 = vector.load %arg11[%c0_35, %c0_36] : memref<8x128xf32, #tpu.memory_space<vmem>>, vector<8x128xf32>
      %cst_37 = arith.constant 3.906250e-03 : f32
      %43 = vector.broadcast %cst_37 : f32 to vector<8x128xf32>
      %44 = arith.mulf %42, %43 : vector<8x128xf32>
      %45 = arith.truncf %44 : vector<8x128xf32> to vector<8x128xbf16>
      %c0_38 = arith.constant 0 : index
      %c0_39 = arith.constant 0 : index
      %46 = vector.load %arg4[%c0_38, %c0_39] : memref<128x128xbf16, #tpu.memory_space<vmem>>, vector<128x128xbf16>
      %cst_40 = arith.constant dense<0.000000e+00> : vector<8x128xf32>
      %47 = tpu.matmul %45, %46, %cst_40 {dimension_numbers = #tpu.dot_dimension_numbers<[1], [0], [0], [1], [0, 0, 1, 1], [], []>} : vector<8x128xbf16>, vector<128x128xbf16>, vector<8x128xf32> -> vector<8x128xf32>
      %c0_41 = arith.constant 0 : index
      %c0_42 = arith.constant 0 : index
      %48 = vector.load %arg5[%c0_41, %c0_42] : memref<1x128xf32, #tpu.memory_space<vmem>>, vector<1x128xf32>
      %49 = vector.broadcast %48 : vector<1x128xf32> to vector<8x128xf32>
      %50 = arith.addf %47, %49 : vector<8x128xf32>
      %cst_43 = arith.constant 0.000000e+00 : f32
      %51 = vector.broadcast %cst_43 : f32 to vector<8x128xf32>
      %52 = arith.maximumf %50, %51 : vector<8x128xf32>
      %53 = arith.truncf %52 : vector<8x128xf32> to vector<8x128xbf16>
      %c0_44 = arith.constant 0 : index
      %c0_45 = arith.constant 0 : index
      %54 = vector.load %arg6[%c0_44, %c0_45] : memref<128x128xbf16, #tpu.memory_space<vmem>>, vector<128x128xbf16>
      %cst_46 = arith.constant dense<0.000000e+00> : vector<8x128xf32>
      %55 = tpu.matmul %53, %54, %cst_46 {dimension_numbers = #tpu.dot_dimension_numbers<[1], [0], [0], [1], [0, 0, 1, 1], [], []>} : vector<8x128xbf16>, vector<128x128xbf16>, vector<8x128xf32> -> vector<8x128xf32>
      %c0_47 = arith.constant 0 : index
      %c0_48 = arith.constant 0 : index
      %56 = vector.load %arg7[%c0_47, %c0_48] : memref<1x128xf32, #tpu.memory_space<vmem>>, vector<1x128xf32>
      %57 = vector.broadcast %56 : vector<1x128xf32> to vector<8x128xf32>
      %58 = arith.addf %55, %57 : vector<8x128xf32>
      %59 = arith.mulf %58, %58 : vector<8x128xf32>
      %cst_49 = arith.constant dense<0.000000e+00> : vector<8xf32>
      %60 = vector.multi_reduction <add>, %59, %cst_49 [1] : vector<8x128xf32> to vector<8xf32>
      %61 = vector.shape_cast %60 : vector<8xf32> to vector<8x1xf32>
      %cst_50 = arith.constant 9.99999996E-13 : f32
      %62 = vector.broadcast %cst_50 : f32 to vector<8x1xf32>
      %63 = arith.addf %61, %62 : vector<8x1xf32>
      %64 = math.rsqrt %63 : vector<8x1xf32>
      %65 = vector.broadcast %64 : vector<8x1xf32> to vector<8x128xf32>
      %66 = arith.mulf %58, %65 : vector<8x128xf32>
      %c0_51 = arith.constant 0 : index
      %c0_52 = arith.constant 0 : index
      %67 = vector.load %arg9[%c0_51, %c0_52] : memref<8x128xf32, #tpu.memory_space<vmem>>, vector<8x128xf32>
      tpu.vector_store %arg9[%c0_51, %c0_52], %66 {strides = array<i32>} : memref<8x128xf32, #tpu.memory_space<vmem>>, vector<8x128xf32>,
    } else {
    }
    return
  }
  func.func @transform_0(%arg0: i32, %arg1: i32) -> (i32, i32, i32) {
    %c0_i32 = arith.constant 0 : i32
    %c0_i32_0 = arith.constant 0 : i32
    return %arg0, %c0_i32, %arg1 : i32, i32, i32
  }
  func.func @transform_1(%arg0: i32, %arg1: i32) -> (i32, i32, i32) {
    %c0_i32 = arith.constant 0 : i32
    %c0_i32_0 = arith.constant 0 : i32
    return %arg0, %c0_i32, %arg1 : i32, i32, i32
  }
  func.func @transform_2(%arg0: i32, %arg1: i32) -> (i32, i32) {
    %c0_i32 = arith.constant 0 : i32
    %c0_i32_0 = arith.constant 0 : i32
    %c0_i32_1 = arith.constant 0 : i32
    return %c0_i32, %c0_i32_0 : i32, i32
  }
  func.func @transform_3(%arg0: i32, %arg1: i32) -> (i32, i32) {
    %c0_i32 = arith.constant 0 : i32
    %c0_i32_0 = arith.constant 0 : i32
    %c0_i32_1 = arith.constant 0 : i32
    return %c0_i32, %c0_i32_0 : i32, i32
  }
  func.func @transform_4(%arg0: i32, %arg1: i32) -> (i32, i32) {
    %c0_i32 = arith.constant 0 : i32
    %c0_i32_0 = arith.constant 0 : i32
    %c0_i32_1 = arith.constant 0 : i32
    return %c0_i32, %c0_i32_0 : i32, i32
  }
  func.func @transform_5(%arg0: i32, %arg1: i32) -> (i32, i32) {
    %c0_i32 = arith.constant 0 : i32
    %c0_i32_0 = arith.constant 0 : i32
    %c0_i32_1 = arith.constant 0 : i32
    return %c0_i32, %c0_i32_0 : i32, i32
  }
  func.func @transform_6(%arg0: i32, %arg1: i32) -> (i32, i32) {
    %c0_i32 = arith.constant 0 : i32
    %c0_i32_0 = arith.constant 0 : i32
    return %arg0, %c0_i32 : i32, i32
  }
  func.func @transform_7(%arg0: i32, %arg1: i32) -> (i32, i32) {
    %c0_i32 = arith.constant 0 : i32
    %c0_i32_0 = arith.constant 0 : i32
    return %arg0, %c0_i32 : i32, i32
  }
}

</mosaic_0001>

<llo_original>
// kernel: tpu_custom_call.1
$region0: #{tpu_custom_call.1}
  #allocation0 [shape = 'u32[]', space=smem, size = 0x4, offset = 0x4, fixed_abs, tag = 'smem constant byte address 0x4 - core index']
  #allocation1 [shape = 'u32[144,128]{1,0:T(1,128)}', space=vmem, size = 0x12000, scoped, tag = 'internal scratch']
  #allocation2 [shape = 'f32[8,128]{1,0:T(8,128)}', space=vmem, size = 0x1000, scoped, tag = 'scratch operand']
  #allocation3 [shape = 'f32[8,128]{1,0:T(8,128)}', space=vmem, size = 0x1000, scoped, tag = 'scratch operand']
  %s0 = inlined_call_operand.hbm [shape: f32[8,4,256], index: 0, kind: input, shape index: {}]
  %s1 = inlined_call_operand.hbm [shape: f32[8,4,256], index: 1, kind: input, shape index: {}]
  %s2 = inlined_call_operand.hbm [shape: bf16[128,128], index: 2, kind: input, shape index: {}]
  %s3 = inlined_call_operand.hbm [shape: f32[1,128], index: 3, kind: input, shape index: {}]
  %s4 = inlined_call_operand.hbm [shape: bf16[128,128], index: 4, kind: input, shape index: {}]
  %s5 = inlined_call_operand.hbm [shape: f32[1,128], index: 5, kind: input, shape index: {}]
  %s6 = inlined_call_operand.hbm [shape: f32[8,128], index: 6, kind: output, shape index: {0}]
  %s7 = inlined_call_operand.hbm [shape: f32[8,128], index: 7, kind: output, shape index: {1}]
  %8 = xla_tuple %s6, %s7
  %s9 = sld [smem:[#allocation0]]
  $region74: #{tpu_custom_call.1} parent=0
    _
  %s11 = ssub.s32 1, %s9
  %s12 = scalar_select 0, %s11, %s9
  $region1: #{tpu_custom_call.1} parent=0
    #allocation4 [shape = 'u8[32768]{0}', space=vmem, size = 0x8000, scoped, tag = 'input window, operand 0, single buffered']
    #allocation5 [shape = 's32[1]{0}', space=sflag, size = 0x4, scoped, tag = 'scoped memory for tpu_custom_call.1']
    #allocation6 [shape = 's32[1]{0}', space=sflag, size = 0x4, scoped, tag = 'scoped memory for tpu_custom_call.1']
    #allocation7 [shape = 'u8[32768]{0}', space=vmem, size = 0x8000, scoped, tag = 'input window, operand 1, single buffered']
    #allocation8 [shape = 's32[1]{0}', space=sflag, size = 0x4, scoped, tag = 'scoped memory for tpu_custom_call.1']
    #allocation9 [shape = 'u8[32768]{0}', space=vmem, size = 0x8000, scoped, tag = 'input window, operand 2, single buffered']
    #allocation10 [shape = 'u8[512]{0}', space=vmem, size = 0x400, scoped, tag = 'input window, operand 3, single buffered']
    #allocation11 [shape = 's32[1]{0}', space=sflag, size = 0x4, scoped, tag = 'scoped memory for tpu_custom_call.1']
    #allocation12 [shape = 'u8[32768]{0}', space=vmem, size = 0x8000, scoped, tag = 'input window, operand 4, single buffered']
    #allocation13 [shape = 'u8[512]{0}', space=vmem, size = 0x400, scoped, tag = 'input window, operand 5, single buffered']
    #allocation14 [shape = 's32[1]{0}', space=sflag, size = 0x4, scoped, tag = 'scoped memory for tpu_custom_call.1']
    #allocation15 [shape = 'u8[4096]{0}', space=vmem, size = 0x1000, scoped, tag = 'output window, operand 0, single buffered']
    #allocation16 [shape = 'u8[4096]{0}', space=vmem, size = 0x1000, scoped, tag = 'output window, operand 1, single buffered']
    #allocation17 [shape = 's32[1]{0}', space=sflag, size = 0x4, scoped, tag = 'scoped memory for tpu_custom_call.1']
    %13 = vsyncpa [#allocation5], 0
    %14 = vsyncpa [#allocation8], 0
    %15 = vsyncpa [#allocation11], 0
    %16 = vsyncpa [#allocation14], 0
    %17 = vsyncpa [#allocation6], 0
    %18 = vsyncpa [#allocation17], 0
    // Predicated region
    $region2: #{tpu_custom_call.1} parent=1 // pred_check
      _
    $region3: #{tpu_custom_call.1} parent=1 // pred_check_branch
      %20 = sbr.rel (0) target = $region5
    $region4: #{tpu_custom_call.1} parent=1 // pred_region
      %s22 = ssub.s32 1024, 1024
      %23 = vsyncadd [#allocation5], %s22
      %s24 = sshll.u32 [#allocation4], 4
      %s25 = int_to_ptr.vmem [resolvable:$true] %s24
      %30 = dma.hbm_to_vmem [thread:$0]  %s0, 1024, %s25, [#allocation5], 128, 128, 8
    $region5: #{tpu_custom_call.1} parent=1 // pred_fallthru
      _
    // Predicated region
    $region6: #{tpu_custom_call.1} parent=1 // pred_check
      _
    $region7: #{tpu_custom_call.1} parent=1 // pred_check_branch
      %32 = sbr.rel (0) target = $region9
    $region8: #{tpu_custom_call.1} parent=1 // pred_region
      %s34 = ssub.s32 1024, 1024
      %35 = vsyncadd [#allocation8], %s34
      %s36 = sshll.u32 [#allocation7], 4
      %s37 = int_to_ptr.vmem [resolvable:$true] %s36
      %42 = dma.hbm_to_vmem [thread:$0]  %s1, 1024, %s37, [#allocation8], 128, 128, 8
    $region9: #{tpu_custom_call.1} parent=1 // pred_fallthru
      _
    // Predicated region
    $region10: #{tpu_custom_call.1} parent=1 // pred_check
      _
    $region11: #{tpu_custom_call.1} parent=1 // pred_check_branch
      %44 = sbr.rel (0) target = $region13
    $region12: #{tpu_custom_call.1} parent=1 // pred_region
      %s46 = ssub.s32 1024, 1024
      %47 = vsyncadd [#allocation8], %s46
      %s48 = sshll.u32 [#allocation9], 4
      %s49 = int_to_ptr.vmem [resolvable:$true] %s48
      %54 = dma.hbm_to_vmem [thread:$0]  %s2, 1024, %s49, [#allocation8], 64, 64, 4
    $region13: #{tpu_custom_call.1} parent=1 // pred_fallthru
      _
    // Predicated region
    $region14: #{tpu_custom_call.1} parent=1 // pred_check
      _
    $region15: #{tpu_custom_call.1} parent=1 // pred_check_branch
      %56 = sbr.rel (0) target = $region17
    $region16: #{tpu_custom_call.1} parent=1 // pred_region
      %s58 = ssub.s32 16, 16
      %59 = vsyncadd [#allocation11], %s58
      %s61 = sshll.u32 [#allocation10], 4
      %s62 = int_to_ptr.vmem [resolvable:$true] %s61
      %64 = dma.hbm_to_vmem [thread:$0]  %s3, 16, %s62, [#allocation11]
    $region17: #{tpu_custom_call.1} parent=1 // pred_fallthru
      _
    // Predicated region
    $region18: #{tpu_custom_call.1} parent=1 // pred_check
      _
    $region19: #{tpu_custom_call.1} parent=1 // pred_check_branch
      %66 = sbr.rel (0) target = $region21
    $region20: #{tpu_custom_call.1} parent=1 // pred_region
      %s68 = ssub.s32 1024, 1024
      %69 = vsyncadd [#allocation11], %s68
      %s70 = sshll.u32 [#allocation12], 4
      %s71 = int_to_ptr.vmem [resolvable:$true] %s70
      %76 = dma.hbm_to_vmem [thread:$0]  %s4, 1024, %s71, [#allocation11], 64, 64, 4
    $region21: #{tpu_custom_call.1} parent=1 // pred_fallthru
      _
    // Predicated region
    $region22: #{tpu_custom_call.1} parent=1 // pred_check
      _
    $region23: #{tpu_custom_call.1} parent=1 // pred_check_branch
      %78 = sbr.rel (0) target = $region25
    $region24: #{tpu_custom_call.1} parent=1 // pred_region
      %s80 = ssub.s32 16, 16
      %81 = vsyncadd [#allocation14], %s80
      %s83 = sshll.u32 [#allocation13], 4
      %s84 = int_to_ptr.vmem [resolvable:$true] %s83
      %86 = dma.hbm_to_vmem [thread:$0]  %s5, 16, %s84, [#allocation14]
    $region25: #{tpu_custom_call.1} parent=1 // pred_fallthru
      _
    // Predicated region
    $region26: #{tpu_custom_call.1} parent=1 // pred_check
      _
    $region27: #{tpu_custom_call.1} parent=1 // pred_check_branch
      %88 = sbr.rel (0) target = $region29
    $region28: #{tpu_custom_call.1} parent=1 // pred_region
      %89 = dma.done [#allocation5], 1024
    $region29: #{tpu_custom_call.1} parent=1 // pred_fallthru
      _
    // Predicated region
    $region30: #{tpu_custom_call.1} parent=1 // pred_check
      _
    $region31: #{tpu_custom_call.1} parent=1 // pred_check_branch
      %91 = sbr.rel (0) target = $region33
    $region32: #{tpu_custom_call.1} parent=1 // pred_region
      %92 = dma.done [#allocation8], 1024
    $region33: #{tpu_custom_call.1} parent=1 // pred_fallthru
      _
    // Predicated region
    $region34: #{tpu_custom_call.1} parent=1 // pred_check
      _
    $region35: #{tpu_custom_call.1} parent=1 // pred_check_branch
      %94 = sbr.rel (0) target = $region37
    $region36: #{tpu_custom_call.1} parent=1 // pred_region
      %95 = dma.done [#allocation8], 1024
    $region37: #{tpu_custom_call.1} parent=1 // pred_fallthru
      _
    // Predicated region
    $region38: #{tpu_custom_call.1} parent=1 // pred_check
      _
    $region39: #{tpu_custom_call.1} parent=1 // pred_check_branch
      %97 = sbr.rel (0) target = $region41
    $region40: #{tpu_custom_call.1} parent=1 // pred_region
      %98 = dma.done [#allocation11], 16
    $region41: #{tpu_custom_call.1} parent=1 // pred_fallthru
      _
    // Predicated region
    $region42: #{tpu_custom_call.1} parent=1 // pred_check
      _
    $region43: #{tpu_custom_call.1} parent=1 // pred_check_branch
      %100 = sbr.rel (0) target = $region45
    $region44: #{tpu_custom_call.1} parent=1 // pred_region
      %101 = dma.done [#allocation11], 1024
    $region45: #{tpu_custom_call.1} parent=1 // pred_fallthru
      _
    // Predicated region
    $region46: #{tpu_custom_call.1} parent=1 // pred_check
      _
    $region47: #{tpu_custom_call.1} parent=1 // pred_check_branch
      %103 = sbr.rel (0) target = $region49
    $region48: #{tpu_custom_call.1} parent=1 // pred_region
      %104 = dma.done [#allocation14], 16
    $region49: #{tpu_custom_call.1} parent=1 // pred_fallthru
      _
    %p106 = scmp.eq.s32.totalorder 0, 0
    // Predicated region
    $region50: #{tpu_custom_call.1} parent=1 // pred_check
      %p107 = pneg %p106
    $region51: #{tpu_custom_call.1} parent=1 // pred_check_branch
      %109 = sbr.rel (%p107) target = $region53
    $region52: #{tpu_custom_call.1} parent=1 // pred_region
      %110 = vst [vmem:[#allocation2] sm:$0xff] 0.0
      %111 = vst [vmem:[#allocation3] sm:$0xff] 0.0
    $region53: #{tpu_custom_call.1} parent=1 // pred_fallthru
      _
    %v112 = vld [vmem:[#allocation2] sm:$0xff]
    %v113 = vld [vmem:[#allocation4] sm:$0xff]
    %v114 = vld [vmem:[#allocation4 + $0x8] sm:$0xff]
    %v115 = vld [vmem:[#allocation4 + $0x10] sm:$0xff]
    %v116 = vld [vmem:[#allocation4 + $0x18] sm:$0xff]
    %v117 = vld [vmem:[#allocation4 + $0x20] sm:$0xff]
    %v118 = vld [vmem:[#allocation4 + $0x28] sm:$0xff]
    %v119 = vld [vmem:[#allocation4 + $0x30] sm:$0xff]
    %v120 = vld [vmem:[#allocation4 + $0x38] sm:$0xff]
    %v129 = vcombine.high %v113, %v113
    %v130 = vcombine.high %v114, %v114
    %v131 = vcombine.high %v115, %v115
    %v132 = vcombine.high %v116, %v116
    %v133 = vcombine.high %v117, %v117
    %v134 = vcombine.high %v118, %v118
    %v135 = vcombine.high %v119, %v119
    %v136 = vcombine.high %v120, %v120
    %vm145 = vcmask 1043456
    %v146 = vsel %vm145, %v113, 0.0
    %v147 = vsel %vm145, %v129, 0.0
    %v148 = vadd.f32 %v146, %v147
    %149 = vadd.xlane.f32.xlu0 %v148
    %v150 = vpop.xlane.xlu0 %149
    %v151 = vsel %vm145, %v114, 0.0
    %v152 = vsel %vm145, %v130, 0.0
    %v153 = vadd.f32 %v151, %v152
    %154 = vadd.xlane.f32.xlu0 %v153
    %v155 = vpop.xlane.xlu0 %154
    %v156 = vsel %vm145, %v115, 0.0
    %v157 = vsel %vm145, %v131, 0.0
    %v158 = vadd.f32 %v156, %v157
    %159 = vadd.xlane.f32.xlu0 %v158
    %v160 = vpop.xlane.xlu0 %159
    %v161 = vsel %vm145, %v116, 0.0
    %v162 = vsel %vm145, %v132, 0.0
    %v163 = vadd.f32 %v161, %v162
    %164 = vadd.xlane.f32.xlu0 %v163
    %v165 = vpop.xlane.xlu0 %164
    %v166 = vsel %vm145, %v117, 0.0
    %v167 = vsel %vm145, %v133, 0.0
    %v168 = vadd.f32 %v166, %v167
    %169 = vadd.xlane.f32.xlu0 %v168
    %v170 = vpop.xlane.xlu0 %169
    %v171 = vsel %vm145, %v118, 0.0
    %v172 = vsel %vm145, %v134, 0.0
    %v173 = vadd.f32 %v171, %v172
    %174 = vadd.xlane.f32.xlu0 %v173
    %v175 = vpop.xlane.xlu0 %174
    %v176 = vsel %vm145, %v119, 0.0
    %v177 = vsel %vm145, %v135, 0.0
    %v178 = vadd.f32 %v176, %v177
    %179 = vadd.xlane.f32.xlu0 %v178
    %v180 = vpop.xlane.xlu0 %179
    %v181 = vsel %vm145, %v120, 0.0
    %v182 = vsel %vm145, %v136, 0.0
    %v183 = vadd.f32 %v181, %v182
    %184 = vadd.xlane.f32.xlu0 %v183
    %v185 = vpop.xlane.xlu0 %184
    %v194 = vlaneseq
    %v195 = vand.u32 %v194, 127
    %v196 = vlaneseq
    %v197 = vshrl.u32 %v196, 7
    %v198 = vsub.s32 %v195, %v197
    %v199 = vrot.slane %v150, %v198
    %v200 = vlaneseq
    %v201 = vshrl.u32 %v200, 7
    %v202 = vsub.s32 %v195, %v201
    %v203 = vrot.slane %v155, %v202
    %v204 = vlaneseq
    %v205 = vshrl.u32 %v204, 7
    %v206 = vsub.s32 %v195, %v205
    %v207 = vrot.slane %v160, %v206
    %v208 = vlaneseq
    %v209 = vshrl.u32 %v208, 7
    %v210 = vsub.s32 %v195, %v209
    %v211 = vrot.slane %v165, %v210
    %v212 = vlaneseq
    %v213 = vshrl.u32 %v212, 7
    %v214 = vsub.s32 %v195, %v213
    %v215 = vrot.slane %v170, %v214
    %v216 = vlaneseq
    %v217 = vshrl.u32 %v216, 7
    %v218 = vsub.s32 %v195, %v217
    %v219 = vrot.slane %v175, %v218
    %v220 = vlaneseq
    %v221 = vshrl.u32 %v220, 7
    %v222 = vsub.s32 %v195, %v221
    %v223 = vrot.slane %v180, %v222
    %v224 = vlaneseq
    %v225 = vshrl.u32 %v224, 7
    %v226 = vsub.s32 %v195, %v225
    %v227 = vrot.slane %v185, %v226
    %vm228 = vcmask 1041409
    %v229 = vsel %vm228, %v203, %v199
    %vm230 = vcmask 1042434
    %v231 = vsel %vm230, %v207, %v229
    %vm232 = vcmask 1043459
    %v233 = vsel %vm232, %v211, %v231
    %vm234 = vcmask 1044484
    %v235 = vsel %vm234, %v215, %v233
    %vm236 = vcmask 1045509
    %v237 = vsel %vm236, %v219, %v235
    %vm238 = vcmask 1046534
    %v239 = vsel %vm238, %v223, %v237
    %vm240 = vcmask 1047559
    %v241 = vsel %vm240, %v227, %v239
    %v243 = vadd.f32 %v112, %v241
    %vm244 = vcmask 31744
    %245 = vst.msk [vmem:[#allocation2] sm:$0xff] %vm244, %v243
    %v246 = vld [vmem:[#allocation3] sm:$0xff]
    %v247 = vld [vmem:[#allocation7] sm:$0xff]
    %v248 = vld [vmem:[#allocation7 + $0x8] sm:$0xff]
    %v249 = vld [vmem:[#allocation7 + $0x10] sm:$0xff]
    %v250 = vld [vmem:[#allocation7 + $0x18] sm:$0xff]
    %v251 = vld [vmem:[#allocation7 + $0x20] sm:$0xff]
    %v252 = vld [vmem:[#allocation7 + $0x28] sm:$0xff]
    %v253 = vld [vmem:[#allocation7 + $0x30] sm:$0xff]
    %v254 = vld [vmem:[#allocation7 + $0x38] sm:$0xff]
    %v263 = vcombine.high %v247, %v247
    %v264 = vcombine.high %v248, %v248
    %v265 = vcombine.high %v249, %v249
    %v266 = vcombine.high %v250, %v250
    %v267 = vcombine.high %v251, %v251
    %v268 = vcombine.high %v252, %v252
    %v269 = vcombine.high %v253, %v253
    %v270 = vcombine.high %v254, %v254
    %v279 = vsel %vm145, %v247, 0.0
    %v280 = vsel %vm145, %v263, 0.0
    %v281 = vadd.f32 %v279, %v280
    %282 = vadd.xlane.f32.xlu0 %v281
    %v283 = vpop.xlane.xlu0 %282
    %v284 = vsel %vm145, %v248, 0.0
    %v285 = vsel %vm145, %v264, 0.0
    %v286 = vadd.f32 %v284, %v285
    %287 = vadd.xlane.f32.xlu0 %v286
    %v288 = vpop.xlane.xlu0 %287
    %v289 = vsel %vm145, %v249, 0.0
    %v290 = vsel %vm145, %v265, 0.0
    %v291 = vadd.f32 %v289, %v290
    %292 = vadd.xlane.f32.xlu0 %v291
    %v293 = vpop.xlane.xlu0 %292
    %v294 = vsel %vm145, %v250, 0.0
    %v295 = vsel %vm145, %v266, 0.0
    %v296 = vadd.f32 %v294, %v295
    %297 = vadd.xlane.f32.xlu0 %v296
    %v298 = vpop.xlane.xlu0 %297
    %v299 = vsel %vm145, %v251, 0.0
    %v300 = vsel %vm145, %v267, 0.0
    %v301 = vadd.f32 %v299, %v300
    %302 = vadd.xlane.f32.xlu0 %v301
    %v303 = vpop.xlane.xlu0 %302
    %v304 = vsel %vm145, %v252, 0.0
    %v305 = vsel %vm145, %v268, 0.0
    %v306 = vadd.f32 %v304, %v305
    %307 = vadd.xlane.f32.xlu0 %v306
    %v308 = vpop.xlane.xlu0 %307
    %v309 = vsel %vm145, %v253, 0.0
    %v310 = vsel %vm145, %v269, 0.0
    %v311 = vadd.f32 %v309, %v310
    %312 = vadd.xlane.f32.xlu0 %v311
    %v313 = vpop.xlane.xlu0 %312
    %v314 = vsel %vm145, %v254, 0.0
    %v315 = vsel %vm145, %v270, 0.0
    %v316 = vadd.f32 %v314, %v315
    %317 = vadd.xlane.f32.xlu0 %v316
    %v318 = vpop.xlane.xlu0 %317
    %v327 = vlaneseq
    %v328 = vshrl.u32 %v327, 7
    %v329 = vsub.s32 %v195, %v328
    %v330 = vrot.slane %v283, %v329
    %v331 = vlaneseq
    %v332 = vshrl.u32 %v331, 7
    %v333 = vsub.s32 %v195, %v332
    %v334 = vrot.slane %v288, %v333
    %v335 = vlaneseq
    %v336 = vshrl.u32 %v335, 7
    %v337 = vsub.s32 %v195, %v336
    %v338 = vrot.slane %v293, %v337
    %v339 = vlaneseq
    %v340 = vshrl.u32 %v339, 7
    %v341 = vsub.s32 %v195, %v340
    %v342 = vrot.slane %v298, %v341
    %v343 = vlaneseq
    %v344 = vshrl.u32 %v343, 7
    %v345 = vsub.s32 %v195, %v344
    %v346 = vrot.slane %v303, %v345
    %v347 = vlaneseq
    %v348 = vshrl.u32 %v347, 7
    %v349 = vsub.s32 %v195, %v348
    %v350 = vrot.slane %v308, %v349
    %v351 = vlaneseq
    %v352 = vshrl.u32 %v351, 7
    %v353 = vsub.s32 %v195, %v352
    %v354 = vrot.slane %v313, %v353
    %v355 = vlaneseq
    %v356 = vshrl.u32 %v355, 7
    %v357 = vsub.s32 %v195, %v356
    %v358 = vrot.slane %v318, %v357
    %v359 = vsel %vm228, %v334, %v330
    %v360 = vsel %vm230, %v338, %v359
    %v361 = vsel %vm232, %v342, %v360
    %v362 = vsel %vm234, %v346, %v361
    %v363 = vsel %vm236, %v350, %v362
    %v364 = vsel %vm238, %v354, %v363
    %v365 = vsel %vm240, %v358, %v364
    %v367 = vadd.f32 %v246, %v365
    %368 = vst.msk [vmem:[#allocation3] sm:$0xff] %vm244, %v367
    // Predicated region
    $region54: #{tpu_custom_call.1} parent=1 // pred_check
      %p369 = pneg %p106
    $region55: #{tpu_custom_call.1} parent=1 // pred_check_branch
      %371 = sbr.rel (%p369) target = $region57
    $region56: #{tpu_custom_call.1} parent=1 // pred_region
      %v372 = vld [vmem:[#allocation2] sm:$0xff]
      %v373 = vmul.f32 %v372, 0.00390625
      %v374 = vpack.c.bf16 %v373, %v373
      %v375 = vld [vmem:[#allocation9] sm:$0xf]
      %v376 = vld [vmem:[#allocation9 + $0x4] sm:$0xf]
      %v377 = vld [vmem:[#allocation9 + $0x8] sm:$0xf]
      %v378 = vld [vmem:[#allocation9 + $0xc] sm:$0xf]
      %v379 = vld [vmem:[#allocation9 + $0x10] sm:$0xf]
      %v380 = vld [vmem:[#allocation9 + $0x14] sm:$0xf]
      %v381 = vld [vmem:[#allocation9 + $0x18] sm:$0xf]
      %v382 = vld [vmem:[#allocation9 + $0x1c] sm:$0xf]
      %v383 = vld [vmem:[#allocation9 + $0x20] sm:$0xf]
      %v384 = vld [vmem:[#allocation9 + $0x24] sm:$0xf]
      %v385 = vld [vmem:[#allocation9 + $0x28] sm:$0xf]
      %v386 = vld [vmem:[#allocation9 + $0x2c] sm:$0xf]
      %v387 = vld [vmem:[#allocation9 + $0x30] sm:$0xf]
      %v388 = vld [vmem:[#allocation9 + $0x34] sm:$0xf]
      %v389 = vld [vmem:[#allocation9 + $0x38] sm:$0xf]
      %v390 = vld [vmem:[#allocation9 + $0x3c] sm:$0xf]
      %v391 = vld [vmem:[#allocation10] sm:$0x1]
      %v393 = vlaneseq
      %v394 = vshrl.u32 %v393, 7
      %v395 = vsub.s32 0, %v394
      %v396 = vrot.slane %v391, %v395
      %v414 = vunpack.c.l.b16 %v375
      %v415 = vunpack.c.l.b16 %v376
      %v416 = vunpack.c.l.b16 %v377
      %v417 = vunpack.c.l.b16 %v378
      %v418 = vunpack.c.l.b16 %v379
      %v419 = vunpack.c.l.b16 %v380
      %v420 = vunpack.c.l.b16 %v381
      %v421 = vunpack.c.l.b16 %v382
      %v422 = vunpack.c.l.b16 %v383
      %v423 = vunpack.c.l.b16 %v384
      %v424 = vunpack.c.l.b16 %v385
      %v425 = vunpack.c.l.b16 %v386
      %v426 = vunpack.c.l.b16 %v387
      %v427 = vunpack.c.l.b16 %v388
      %v428 = vunpack.c.l.b16 %v389
      %v429 = vunpack.c.l.b16 %v390
      %v430 = vpack.c.b16 %v415, %v414
      %v431 = vpack.c.b16 %v417, %v416
      %v432 = vpack.c.b16 %v419, %v418
      %v433 = vpack.c.b16 %v421, %v420
      %v434 = vpack.c.b16 %v423, %v422
      %v435 = vpack.c.b16 %v425, %v424
      %v436 = vpack.c.b16 %v427, %v426
      %v437 = vpack.c.b16 %v429, %v428
      %446 = vmatprep.subr.bf16.mxu0 0
      %447 = vmatpush1.bf16.msra.mxu0 %v430
      %448 = vmatprep.subr.bf16.mxu0 0
      %449 = vmatpush1.bf16.msra.mxu0 %v431
      %450 = vmatprep.subr.bf16.mxu0 0
      %451 = vmatpush1.bf16.msra.mxu0 %v432
      %452 = vmatprep.subr.bf16.mxu0 0
      %453 = vmatpush1.bf16.msra.mxu0 %v433
      %454 = vmatprep.subr.bf16.mxu0 0
      %455 = vmatpush1.bf16.msra.mxu0 %v434
      %456 = vmatprep.subr.bf16.mxu0 0
      %457 = vmatpush1.bf16.msra.mxu0 %v435
      %458 = vmatprep.subr.bf16.mxu0 0
      %459 = vmatpush1.bf16.msra.mxu0 %v436
      %460 = vmatprep.subr.bf16.mxu0 0
      %461 = vmatpush1.bf16.msra.mxu0 %v437
      %462 = vmatprep.subr.bf16.mxu0 0
      %463 = vmatpush1.bf16.msra.mxu0 0
      %464 = vmatprep.subr.bf16.mxu0 0
      %465 = vmatpush1.bf16.msra.mxu0 0
      %466 = vmatprep.subr.bf16.mxu0 0
      %467 = vmatpush1.bf16.msra.mxu0 0
      %468 = vmatprep.subr.bf16.mxu0 0
      %469 = vmatpush1.bf16.msra.mxu0 0
      %470 = vmatprep.subr.bf16.mxu0 0
      %471 = vmatpush1.bf16.msra.mxu0 0
      %472 = vmatprep.subr.bf16.mxu0 0
      %473 = vmatpush1.bf16.msra.mxu0 0
      %474 = vmatprep.subr.bf16.mxu0 0
      %475 = vmatpush1.bf16.msra.mxu0 0
      %476 = vmatprep.subr.bf16.mxu0 0
      %477 = vmatpush1.bf16.msra.mxu0 0
      %478 = vmatprep.mubr.bf16.mxu0 0
      %479 = vmatmul.mubr.bf16.gmra.mrb[0].mxu0 %v374
      %v480 = vpop.f32.mrb[0].mxu0
      %v481 = vadd.f32 %v396, %v480
      %v482 = vpop.f32.mrb[0].mxu0
      %v483 = vpop.f32.mrb[0].mxu0
      %v484 = vpop.f32.mrb[0].mxu0
      %485 = vdwg.mxu0
      %v486 = vmax.f32 %v481, 0.0
      %v487 = vpack.c.bf16 %v486, %v486
      %v488 = vld [vmem:[#allocation12] sm:$0xf]
      %v489 = vld [vmem:[#allocation12 + $0x4] sm:$0xf]
      %v490 = vld [vmem:[#allocation12 + $0x8] sm:$0xf]
      %v491 = vld [vmem:[#allocation12 + $0xc] sm:$0xf]
      %v492 = vld [vmem:[#allocation12 + $0x10] sm:$0xf]
      %v493 = vld [vmem:[#allocation12 + $0x14] sm:$0xf]
      %v494 = vld [vmem:[#allocation12 + $0x18] sm:$0xf]
      %v495 = vld [vmem:[#allocation12 + $0x1c] sm:$0xf]
      %v496 = vld [vmem:[#allocation12 + $0x20] sm:$0xf]
      %v497 = vld [vmem:[#allocation12 + $0x24] sm:$0xf]
      %v498 = vld [vmem:[#allocation12 + $0x28] sm:$0xf]
      %v499 = vld [vmem:[#allocation12 + $0x2c] sm:$0xf]
      %v500 = vld [vmem:[#allocation12 + $0x30] sm:$0xf]
      %v501 = vld [vmem:[#allocation12 + $0x34] sm:$0xf]
      %v502 = vld [vmem:[#allocation12 + $0x38] sm:$0xf]
      %v503 = vld [vmem:[#allocation12 + $0x3c] sm:$0xf]
      %v504 = vld [vmem:[#allocation13] sm:$0x1]
      %v506 = vlaneseq
      %v507 = vshrl.u32 %v506, 7
      %v508 = vsub.s32 0, %v507
      %v509 = vrot.slane %v504, %v508
      %v527 = vunpack.c.l.b16 %v488
      %v528 = vunpack.c.l.b16 %v489
      %v529 = vunpack.c.l.b16 %v490
      %v530 = vunpack.c.l.b16 %v491
      %v531 = vunpack.c.l.b16 %v492
      %v532 = vunpack.c.l.b16 %v493
      %v533 = vunpack.c.l.b16 %v494
      %v534 = vunpack.c.l.b16 %v495
      %v535 = vunpack.c.l.b16 %v496
      %v536 = vunpack.c.l.b16 %v497
      %v537 = vunpack.c.l.b16 %v498
      %v538 = vunpack.c.l.b16 %v499
      %v539 = vunpack.c.l.b16 %v500
      %v540 = vunpack.c.l.b16 %v501
      %v541 = vunpack.c.l.b16 %v502
      %v542 = vunpack.c.l.b16 %v503
      %v543 = vpack.c.b16 %v528, %v527
      %v544 = vpack.c.b16 %v530, %v529
      %v545 = vpack.c.b16 %v532, %v531
      %v546 = vpack.c.b16 %v534, %v533
      %v547 = vpack.c.b16 %v536, %v535
      %v548 = vpack.c.b16 %v538, %v537
      %v549 = vpack.c.b16 %v540, %v539
      %v550 = vpack.c.b16 %v542, %v541
      %559 = vmatprep.subr.bf16.mxu0 0
      %560 = vmatpush1.bf16.msra.mxu0 %v543
      %561 = vmatprep.subr.bf16.mxu0 0
      %562 = vmatpush1.bf16.msra.mxu0 %v544
      %563 = vmatprep.subr.bf16.mxu0 0
      %564 = vmatpush1.bf16.msra.mxu0 %v545
      %565 = vmatprep.subr.bf16.mxu0 0
      %566 = vmatpush1.bf16.msra.mxu0 %v546
      %567 = vmatprep.subr.bf16.mxu0 0
      %568 = vmatpush1.bf16.msra.mxu0 %v547
      %569 = vmatprep.subr.bf16.mxu0 0
      %570 = vmatpush1.bf16.msra.mxu0 %v548
      %571 = vmatprep.subr.bf16.mxu0 0
      %572 = vmatpush1.bf16.msra.mxu0 %v549
      %573 = vmatprep.subr.bf16.mxu0 0
      %574 = vmatpush1.bf16.msra.mxu0 %v550
      %575 = vmatprep.subr.bf16.mxu0 0
      %576 = vmatpush1.bf16.msra.mxu0 0
      %577 = vmatprep.subr.bf16.mxu0 0
      %578 = vmatpush1.bf16.msra.mxu0 0
      %579 = vmatprep.subr.bf16.mxu0 0
      %580 = vmatpush1.bf16.msra.mxu0 0
      %581 = vmatprep.subr.bf16.mxu0 0
      %582 = vmatpush1.bf16.msra.mxu0 0
      %583 = vmatprep.subr.bf16.mxu0 0
      %584 = vmatpush1.bf16.msra.mxu0 0
      %585 = vmatprep.subr.bf16.mxu0 0
      %586 = vmatpush1.bf16.msra.mxu0 0
      %587 = vmatprep.subr.bf16.mxu0 0
      %588 = vmatpush1.bf16.msra.mxu0 0
      %589 = vmatprep.subr.bf16.mxu0 0
      %590 = vmatpush1.bf16.msra.mxu0 0
      %591 = vmatprep.mubr.bf16.mxu0 0
      %592 = vmatmul.mubr.bf16.gmra.mrb[0].mxu0 %v487
      %v593 = vpop.f32.mrb[0].mxu0
      %v594 = vadd.f32 %v509, %v593
      %v595 = vpop.f32.mrb[0].mxu0
      %v596 = vpop.f32.mrb[0].mxu0
      %v597 = vpop.f32.mrb[0].mxu0
      %598 = vdwg.mxu0
      %v599 = vmul.f32 %v594, %v594
      %600 = vadd.xlane.f32.xlu0 %v599
      %v601 = vpop.xlane.xlu0 %600
      %v602 = vadd.f32 %v601, 1e-12
      %v603 = vrsqrt.pop %v602
      %v604 = vmul.f32 %v594, %v603
      %605 = vst [vmem:[#allocation15] sm:$0xff] %v604
      %v606 = vld [vmem:[#allocation3] sm:$0xff]
      %v607 = vmul.f32 %v606, 0.00390625
      %v608 = vpack.c.bf16 %v607, %v607
      %v609 = vld [vmem:[#allocation9] sm:$0xf]
      %v610 = vld [vmem:[#allocation9 + $0x4] sm:$0xf]
      %v611 = vld [vmem:[#allocation9 + $0x8] sm:$0xf]
      %v612 = vld [vmem:[#allocation9 + $0xc] sm:$0xf]
      %v613 = vld [vmem:[#allocation9 + $0x10] sm:$0xf]
      %v614 = vld [vmem:[#allocation9 + $0x14] sm:$0xf]
      %v615 = vld [vmem:[#allocation9 + $0x18] sm:$0xf]
      %v616 = vld [vmem:[#allocation9 + $0x1c] sm:$0xf]
      %v617 = vld [vmem:[#allocation9 + $0x20] sm:$0xf]
      %v618 = vld [vmem:[#allocation9 + $0x24] sm:$0xf]
      %v619 = vld [vmem:[#allocation9 + $0x28] sm:$0xf]
      %v620 = vld [vmem:[#allocation9 + $0x2c] sm:$0xf]
      %v621 = vld [vmem:[#allocation9 + $0x30] sm:$0xf]
      %v622 = vld [vmem:[#allocation9 + $0x34] sm:$0xf]
      %v623 = vld [vmem:[#allocation9 + $0x38] sm:$0xf]
      %v624 = vld [vmem:[#allocation9 + $0x3c] sm:$0xf]
      %v625 = vld [vmem:[#allocation10] sm:$0x1]
      %v627 = vlaneseq
      %v628 = vshrl.u32 %v627, 7
      %v629 = vsub.s32 0, %v628
      %v630 = vrot.slane %v625, %v629
      %v648 = vunpack.c.l.b16 %v609
      %v649 = vunpack.c.l.b16 %v610
      %v650 = vunpack.c.l.b16 %v611
      %v651 = vunpack.c.l.b16 %v612
      %v652 = vunpack.c.l.b16 %v613
      %v653 = vunpack.c.l.b16 %v614
      %v654 = vunpack.c.l.b16 %v615
      %v655 = vunpack.c.l.b16 %v616
      %v656 = vunpack.c.l.b16 %v617
      %v657 = vunpack.c.l.b16 %v618
      %v658 = vunpack.c.l.b16 %v619
      %v659 = vunpack.c.l.b16 %v620
      %v660 = vunpack.c.l.b16 %v621
      %v661 = vunpack.c.l.b16 %v622
      %v662 = vunpack.c.l.b16 %v623
      %v663 = vunpack.c.l.b16 %v624
      %v664 = vpack.c.b16 %v649, %v648
      %v665 = vpack.c.b16 %v651, %v650
      %v666 = vpack.c.b16 %v653, %v652
      %v667 = vpack.c.b16 %v655, %v654
      %v668 = vpack.c.b16 %v657, %v656
      %v669 = vpack.c.b16 %v659, %v658
      %v670 = vpack.c.b16 %v661, %v660
      %v671 = vpack.c.b16 %v663, %v662
      %680 = vmatprep.subr.bf16.mxu0 0
      %681 = vmatpush1.bf16.msra.mxu0 %v664
      %682 = vmatprep.subr.bf16.mxu0 0
      %683 = vmatpush1.bf16.msra.mxu0 %v665
      %684 = vmatprep.subr.bf16.mxu0 0
      %685 = vmatpush1.bf16.msra.mxu0 %v666
      %686 = vmatprep.subr.bf16.mxu0 0
      %687 = vmatpush1.bf16.msra.mxu0 %v667
      %688 = vmatprep.subr.bf16.mxu0 0
      %689 = vmatpush1.bf16.msra.mxu0 %v668
      %690 = vmatprep.subr.bf16.mxu0 0
      %691 = vmatpush1.bf16.msra.mxu0 %v669
      %692 = vmatprep.subr.bf16.mxu0 0
      %693 = vmatpush1.bf16.msra.mxu0 %v670
      %694 = vmatprep.subr.bf16.mxu0 0
      %695 = vmatpush1.bf16.msra.mxu0 %v671
      %696 = vmatprep.subr.bf16.mxu0 0
      %697 = vmatpush1.bf16.msra.mxu0 0
      %698 = vmatprep.subr.bf16.mxu0 0
      %699 = vmatpush1.bf16.msra.mxu0 0
      %700 = vmatprep.subr.bf16.mxu0 0
      %701 = vmatpush1.bf16.msra.mxu0 0
      %702 = vmatprep.subr.bf16.mxu0 0
      %703 = vmatpush1.bf16.msra.mxu0 0
      %704 = vmatprep.subr.bf16.mxu0 0
      %705 = vmatpush1.bf16.msra.mxu0 0
      %706 = vmatprep.subr.bf16.mxu0 0
      %707 = vmatpush1.bf16.msra.mxu0 0
      %708 = vmatprep.subr.bf16.mxu0 0
      %709 = vmatpush1.bf16.msra.mxu0 0
      %710 = vmatprep.subr.bf16.mxu0 0
      %711 = vmatpush1.bf16.msra.mxu0 0
      %712 = vmatprep.mubr.bf16.mxu0 0
      %713 = vmatmul.mubr.bf16.gmra.mrb[0].mxu0 %v608
      %v714 = vpop.f32.mrb[0].mxu0
      %v715 = vadd.f32 %v630, %v714
      %v716 = vpop.f32.mrb[0].mxu0
      %v717 = vpop.f32.mrb[0].mxu0
      %v718 = vpop.f32.mrb[0].mxu0
      %719 = vdwg.mxu0
      %v720 = vmax.f32 %v715, 0.0
      %v721 = vpack.c.bf16 %v720, %v720
      %v722 = vld [vmem:[#allocation12] sm:$0xf]
      %v723 = vld [vmem:[#allocation12 + $0x4] sm:$0xf]
      %v724 = vld [vmem:[#allocation12 + $0x8] sm:$0xf]
      %v725 = vld [vmem:[#allocation12 + $0xc] sm:$0xf]
      %v726 = vld [vmem:[#allocation12 + $0x10] sm:$0xf]
      %v727 = vld [vmem:[#allocation12 + $0x14] sm:$0xf]
      %v728 = vld [vmem:[#allocation12 + $0x18] sm:$0xf]
      %v729 = vld [vmem:[#allocation12 + $0x1c] sm:$0xf]
      %v730 = vld [vmem:[#allocation12 + $0x20] sm:$0xf]
      %v731 = vld [vmem:[#allocation12 + $0x24] sm:$0xf]
      %v732 = vld [vmem:[#allocation12 + $0x28] sm:$0xf]
      %v733 = vld [vmem:[#allocation12 + $0x2c] sm:$0xf]
      %v734 = vld [vmem:[#allocation12 + $0x30] sm:$0xf]
      %v735 = vld [vmem:[#allocation12 + $0x34] sm:$0xf]
      %v736 = vld [vmem:[#allocation12 + $0x38] sm:$0xf]
      %v737 = vld [vmem:[#allocation12 + $0x3c] sm:$0xf]
      %v738 = vld [vmem:[#allocation13] sm:$0x1]
      %v740 = vlaneseq
      %v741 = vshrl.u32 %v740, 7
      %v742 = vsub.s32 0, %v741
      %v743 = vrot.slane %v738, %v742
      %v761 = vunpack.c.l.b16 %v722
      %v762 = vunpack.c.l.b16 %v723
      %v763 = vunpack.c.l.b16 %v724
      %v764 = vunpack.c.l.b16 %v725
      %v765 = vunpack.c.l.b16 %v726
      %v766 = vunpack.c.l.b16 %v727
      %v767 = vunpack.c.l.b16 %v728
      %v768 = vunpack.c.l.b16 %v729
      %v769 = vunpack.c.l.b16 %v730
      %v770 = vunpack.c.l.b16 %v731
      %v771 = vunpack.c.l.b16 %v732
      %v772 = vunpack.c.l.b16 %v733
      %v773 = vunpack.c.l.b16 %v734
      %v774 = vunpack.c.l.b16 %v735
      %v775 = vunpack.c.l.b16 %v736
      %v776 = vunpack.c.l.b16 %v737
      %v777 = vpack.c.b16 %v762, %v761
      %v778 = vpack.c.b16 %v764, %v763
      %v779 = vpack.c.b16 %v766, %v765
      %v780 = vpack.c.b16 %v768, %v767
      %v781 = vpack.c.b16 %v770, %v769
      %v782 = vpack.c.b16 %v772, %v771
      %v783 = vpack.c.b16 %v774, %v773
      %v784 = vpack.c.b16 %v776, %v775
      %793 = vmatprep.subr.bf16.mxu0 0
      %794 = vmatpush1.bf16.msra.mxu0 %v777
      %795 = vmatprep.subr.bf16.mxu0 0
      %796 = vmatpush1.bf16.msra.mxu0 %v778
      %797 = vmatprep.subr.bf16.mxu0 0
      %798 = vmatpush1.bf16.msra.mxu0 %v779
      %799 = vmatprep.subr.bf16.mxu0 0
      %800 = vmatpush1.bf16.msra.mxu0 %v780
      %801 = vmatprep.subr.bf16.mxu0 0
      %802 = vmatpush1.bf16.msra.mxu0 %v781
      %803 = vmatprep.subr.bf16.mxu0 0
      %804 = vmatpush1.bf16.msra.mxu0 %v782
      %805 = vmatprep.subr.bf16.mxu0 0
      %806 = vmatpush1.bf16.msra.mxu0 %v783
      %807 = vmatprep.subr.bf16.mxu0 0
      %808 = vmatpush1.bf16.msra.mxu0 %v784
      %809 = vmatprep.subr.bf16.mxu0 0
      %810 = vmatpush1.bf16.msra.mxu0 0
      %811 = vmatprep.subr.bf16.mxu0 0
      %812 = vmatpush1.bf16.msra.mxu0 0
      %813 = vmatprep.subr.bf16.mxu0 0
      %814 = vmatpush1.bf16.msra.mxu0 0
      %815 = vmatprep.subr.bf16.mxu0 0
      %816 = vmatpush1.bf16.msra.mxu0 0
      %817 = vmatprep.subr.bf16.mxu0 0
      %818 = vmatpush1.bf16.msra.mxu0 0
      %819 = vmatprep.subr.bf16.mxu0 0
      %820 = vmatpush1.bf16.msra.mxu0 0
      %821 = vmatprep.subr.bf16.mxu0 0
      %822 = vmatpush1.bf16.msra.mxu0 0
      %823 = vmatprep.subr.bf16.mxu0 0
      %824 = vmatpush1.bf16.msra.mxu0 0
      %825 = vmatprep.mubr.bf16.mxu0 0
      %826 = vmatmul.mubr.bf16.gmra.mrb[0].mxu0 %v721
      %v827 = vpop.f32.mrb[0].mxu0
      %v828 = vadd.f32 %v743, %v827
      %v829 = vpop.f32.mrb[0].mxu0
      %v830 = vpop.f32.mrb[0].mxu0
      %v831 = vpop.f32.mrb[0].mxu0
      %832 = vdwg.mxu0
      %v833 = vmul.f32 %v828, %v828
      %834 = vadd.xlane.f32.xlu0 %v833
      %v835 = vpop.xlane.xlu0 %834
      %v836 = vadd.f32 %v835, 1e-12
      %v837 = vrsqrt.pop %v836
      %v838 = vmul.f32 %v828, %v837
      %839 = vst [vmem:[#allocation16] sm:$0xff] %v838
    $region57: #{tpu_custom_call.1} parent=1 // pred_fallthru
      _
    // Predicated region
    $region58: #{tpu_custom_call.1} parent=1 // pred_check
      _
    $region59: #{tpu_custom_call.1} parent=1 // pred_check_branch
      %841 = sbr.rel (0) target = $region61
    $region60: #{tpu_custom_call.1} parent=1 // pred_region
      %s843 = ssub.s32 128, 128
      %844 = vsyncadd [#allocation6], %s843
      %s846 = sshll.u32 [#allocation15], 4
      %s847 = int_to_ptr.vmem [resolvable:$true] %s846
      %849 = dma.vmem_to_hbm [thread:$0]  %s847, 128, %s6, [#allocation6]
    $region61: #{tpu_custom_call.1} parent=1 // pred_fallthru
      _
    // Predicated region
    $region62: #{tpu_custom_call.1} parent=1 // pred_check
      _
    $region63: #{tpu_custom_call.1} parent=1 // pred_check_branch
      %851 = sbr.rel (0) target = $region65
    $region64: #{tpu_custom_call.1} parent=1 // pred_region
      %s853 = ssub.s32 128, 128
      %854 = vsyncadd [#allocation17], %s853
      %s856 = sshll.u32 [#allocation16], 4
      %s857 = int_to_ptr.vmem [resolvable:$true] %s856
      %859 = dma.vmem_to_hbm [thread:$0]  %s857, 128, %s7, [#allocation17]
    $region65: #{tpu_custom_call.1} parent=1 // pred_fallthru
      _
    // Predicated region
    $region66: #{tpu_custom_call.1} parent=1 // pred_check
      _
    $region67: #{tpu_custom_call.1} parent=1 // pred_check_branch
      %861 = sbr.rel (0) target = $region69
    $region68: #{tpu_custom_call.1} parent=1 // pred_region
      %862 = dma.done [#allocation6], 128
    $region69: #{tpu_custom_call.1} parent=1 // pred_fallthru
      _
    // Predicated region
    $region70: #{tpu_custom_call.1} parent=1 // pred_check
      _
    $region71: #{tpu_custom_call.1} parent=1 // pred_check_branch
      %864 = sbr.rel (0) target = $region73
    $region72: #{tpu_custom_call.1} parent=1 // pred_region
      %865 = dma.done [#allocation17], 128
    $region73: #{tpu_custom_call.1} parent=1 // pred_fallthru
      _
    %866 = vsyncpa [#allocation5], 1
    %867 = vsyncpa [#allocation8], 1
    %868 = vsyncpa [#allocation11], 1
    %869 = vsyncpa [#allocation14], 1
    %870 = vsyncpa [#allocation6], 1
    %871 = vsyncpa [#allocation17], 1

</llo_original>
